<compile_context>
chip_gen: v7x
topology: tpu7x:2x2x1
jax: 0.10.0
libtpu: 0.0.40
codegen_flags: <defaults>
</compile_context>

<pallas_src>
import functools

import jax
import jax.numpy as jnp
from jax import lax
from jax.experimental import pallas as pl
from jax.experimental.pallas import tpu as pltpu

HIDDEN = 256


def _round_up(n, m):
    return ((n + m - 1) // m) * m


def _epilogue_dtype_for_backend():
    """bf16 epilogue on v6e/v7x (bf16 VALUs); f32 on v5e and older."""
    try:
        kind = jax.devices()[0].device_kind.lower()
    except Exception:
        return jnp.bfloat16
    if ("v6" in kind) or ("v7" in kind) or ("7x" in kind):
        return jnp.bfloat16
    return jnp.float32


def _val_net_kernel(x_ref, w1_ref, b1_ref, w2_ref, b2_ref, w3_ref, b3_ref,
                    o_ref, *, ep_dtype):
    # layer1: Linear(input_dim, 256) + ReLU  (bf16 MXU inputs, f32 accum,
    # bias+ReLU in ep_dtype; the bf16 cast is needed for layer2 anyway).
    h1 = jnp.dot(x_ref[...], w1_ref[...], preferred_element_type=jnp.float32)
    h1 = jnp.maximum(h1.astype(ep_dtype) + b1_ref[...], 0).astype(jnp.bfloat16)

    # layer2: Linear(256, 256) + ReLU
    h2 = jnp.dot(h1, w2_ref[...], preferred_element_type=jnp.float32)
    h2 = jnp.maximum(h2.astype(ep_dtype) + b2_ref[...], 0).astype(jnp.bfloat16)

    # layer3: Linear(256, 1), computed as a lane-dense (1, TB) row on the MXU:
    # contract the hidden dim of w3 (1,256) against the hidden dim of h2
    # (TB,256). Keeps the output store full-lane (no masked vst.msk) and the
    # HBM writeback dense. (On v5e this adds a few MXU passes vs. the old VPU
    # reduce, but the lane-dense store/writeback win dominates.)
    out_row = lax.dot_general(
        w3_ref[...], h2,
        dimension_numbers=(((1,), (1,)), ((), ())),
        preferred_element_type=jnp.float32)                    # (1, TB) f32
    o_ref[...] = (out_row + b3_ref[0]).astype(o_ref.dtype)     # lane-dense store


def val_net_forward(x, params, *, tb=1024, ep_dtype=None):
    """x: (B, input_dim) float32 -> (B, 1) float32."""
    w1, b1, w2, b2, w3, b3 = params
    B, D = x.shape
    H = w1.shape[1]

    if ep_dtype is None:
        ep_dtype = _epilogue_dtype_for_backend()

    # ---- batch-tile selection --------------------------------------------
    # Cap at 2048: keeps double-buffered x tiles + f32 (TB,256) temporaries
    # within v5e's 16 MiB default scoped VMEM (32 MiB on v6e/v7x).
    tb = int(max(8, min(tb, 2048)))
    tb = _round_up(tb, 8)
    if B <= 8:
        tb = B                               # single tiny tile (block == array)
    elif B < 2 * tb:
        # Keep >= 2 grid steps so the "parallel" batch axis can split across
        # both TensorCores on v7x (and the DMA pipeline stays active).
        tb = _round_up(pl.cdiv(B, 2), 8)
    num_tiles = pl.cdiv(B, tb)

    # ---- one-time input/bias preparation (outside the kernel) -------------
    x_bf = x.astype(jnp.bfloat16)            # halve per-tile x HBM->VMEM DMA
    b1c = b1.astype(ep_dtype)
    b2c = b2.astype(ep_dtype)
    b3c = b3.reshape((1,)).astype(jnp.float32)   # scalar bias -> SMEM

    # Advisory cost estimate for XLA's scheduler around the custom call.
    flops = 2 * B * (D * H + H * H + H)
    bytes_accessed = (
        x_bf.size * 2
        + (w1.size + w2.size + w3.size) * 2
        + b1c.size * b1c.dtype.itemsize + b2c.size * b2c.dtype.itemsize + 4
        + num_tiles * tb * 4)

    kernel = functools.partial(_val_net_kernel, ep_dtype=ep_dtype)

    out_slab = pl.pallas_call(
        kernel,
        out_shape=jax.ShapeDtypeStruct((num_tiles, 1, tb), jnp.float32),
        grid=(num_tiles,),
        in_specs=[
            pl.BlockSpec((tb, D), lambda i: (i, 0)),   # x: batch-tiled, pipelined
            pl.BlockSpec((D, H), lambda i: (0, 0)),    # w1: VMEM-resident
            pl.BlockSpec((1, H), lambda i: (0, 0)),    # b1
            pl.BlockSpec((H, H), lambda i: (0, 0)),    # w2
            pl.BlockSpec((1, H), lambda i: (0, 0)),    # b2
            pl.BlockSpec((1, H), lambda i: (0, 0)),    # w3 (row form)
            pl.BlockSpec(memory_space=pltpu.MemorySpace.SMEM),  # b3 scalar
        ],
        # Lane-dense output: one (1, tb) row per grid step.
        out_specs=pl.BlockSpec((None, 1, tb), lambda i: (i, 0, 0)),
        compiler_params=pltpu.CompilerParams(
            dimension_semantics=("parallel",)),        # megacore shard on v7x
        cost_estimate=pl.CostEstimate(
            flops=flops, transcendentals=0, bytes_accessed=bytes_accessed),
    )(x_bf, w1, b1c, w2, b2c, w3, b3c)

    # (num_tiles, 1, tb) slab -> (B, 1); any padded rows from a partial last
    # tile are sliced away here and never observed downstream.
    return out_slab.reshape(num_tiles * tb)[:B].reshape(B, 1)


def init_val_net_params(key, input_dim, hidden=HIDDEN):
    """Deterministic synthetic parameters (shapes match Val_net.__init__).

    Weights are kept in bfloat16 (MXU-native); biases stay float32 and are
    cast to the per-generation epilogue dtype inside the wrapper.
    w3 is stored as a (1, hidden) row for the in-kernel lane-dense matmul.
    """
    k1, k2, k3 = jax.random.split(key, 3)
    w1 = (jax.random.normal(k1, (input_dim, hidden), jnp.float32)
          * 0.05).astype(jnp.bfloat16)
    b1 = jnp.zeros((1, hidden), jnp.float32) + 0.01
    w2 = (jax.random.normal(k2, (hidden, hidden), jnp.float32)
          * 0.05).astype(jnp.bfloat16)
    b2 = jnp.zeros((1, hidden), jnp.float32) + 0.01
    w3 = (jax.random.normal(k3, (1, hidden), jnp.float32)
          * 0.05).astype(jnp.bfloat16)
    b3 = jnp.zeros((1,), jnp.float32)
    return (w1, b1, w2, b2, w3, b3)


def _reference_forward(x, params):
    """Pure-JAX f32 reference (weights upcast to f32)."""
    w1, b1, w2, b2, w3, b3 = params
    w1f, w2f, w3f = (w1.astype(jnp.float32), w2.astype(jnp.float32),
                     w3.astype(jnp.float32))
    h1 = jnp.maximum(x @ w1f + b1, 0.0)
    h2 = jnp.maximum(h1 @ w2f + b2, 0.0)
    return h2 @ w3f.T + b3


if __name__ == "__main__":
    key = jax.random.PRNGKey(0)
    kx, kp = jax.random.split(key)

    batch = 512           # -> 2 grid steps (exercises pipeline + megacore path)
    input_dim = 32        # consistent with Linear(input_dim, 256)

    x = jax.random.normal(kx, (batch, input_dim), jnp.float32)
    params = init_val_net_params(kp, input_dim)

    out = val_net_forward(x, params)
    out = jax.block_until_ready(out)

    ref = _reference_forward(x, params)
    assert out.shape == (batch, 1)
    # bf16 MXU inputs (f32 accumulation) -> loosened tolerance vs f32 ref.
    assert jnp.allclose(out, ref, atol=2e-2, rtol=2e-2), (
        float(jnp.max(jnp.abs(out - ref))))

    print("KERNEL_OK")
</pallas_src>

<mosaic_0001>
module attributes {stable_mosaic.version = 11 : i64} {
  func.func @_val_net_kernel(%arg0: i32, %arg1: memref<256x32xbf16, #tpu.memory_space<vmem>>, %arg2: memref<32x256xbf16, #tpu.memory_space<vmem>>, %arg3: memref<1x256xf32, #tpu.memory_space<vmem>>, %arg4: memref<256x256xbf16, #tpu.memory_space<vmem>>, %arg5: memref<1x256xf32, #tpu.memory_space<vmem>>, %arg6: memref<1x256xbf16, #tpu.memory_space<vmem>>, %arg7: memref<1xf32, #tpu.memory_space<smem>>, %arg8: memref<1x1x256xf32, #tpu.memory_space<vmem>>) attributes {dimension_semantics = [#tpu.dimension_semantics<parallel>], iteration_bounds = array<i64: 2>, scalar_prefetch = 0 : i64, scratch_operands = 0 : i64, tpu.core_type = #tpu.core_type<tc>, window_params = [{transform_indices = @transform_0, window_bounds = array<i64: 256, 32>}, {pipeline_mode = #tpu.pipeline_mode<synchronous>, transform_indices = @transform_1, window_bounds = array<i64: 32, 256>}, {pipeline_mode = #tpu.pipeline_mode<synchronous>, transform_indices = @transform_2, window_bounds = array<i64: 1, 256>}, {pipeline_mode = #tpu.pipeline_mode<synchronous>, transform_indices = @transform_3, window_bounds = array<i64: 256, 256>}, {pipeline_mode = #tpu.pipeline_mode<synchronous>, transform_indices = @transform_4, window_bounds = array<i64: 1, 256>}, {pipeline_mode = #tpu.pipeline_mode<synchronous>, transform_indices = @transform_5, window_bounds = array<i64: 1, 256>}, {transform_indices = @transform_6, window_bounds = array<i64: 1>}, {transform_indices = @transform_7, window_bounds = array<i64: 1, 1, 256>}]} {
    %c0 = arith.constant 0 : index
    %c0_0 = arith.constant 0 : index
    %0 = vector.load %arg1[%c0, %c0_0] : memref<256x32xbf16, #tpu.memory_space<vmem>>, vector<256x32xbf16>
    %c0_1 = arith.constant 0 : index
    %c0_2 = arith.constant 0 : index
    %1 = vector.load %arg2[%c0_1, %c0_2] : memref<32x256xbf16, #tpu.memory_space<vmem>>, vector<32x256xbf16>
    %cst = arith.constant dense<0.000000e+00> : vector<256x256xf32>
    %2 = tpu.matmul %0, %1, %cst {dimension_numbers = #tpu.dot_dimension_numbers<[1], [0], [0], [1], [0, 0, 1, 1], [], []>} : vector<256x32xbf16>, vector<32x256xbf16>, vector<256x256xf32> -> vector<256x256xf32>
    %c0_3 = arith.constant 0 : index
    %c0_4 = arith.constant 0 : index
    %3 = vector.load %arg3[%c0_3, %c0_4] : memref<1x256xf32, #tpu.memory_space<vmem>>, vector<1x256xf32>
    %4 = vector.broadcast %3 : vector<1x256xf32> to vector<256x256xf32>
    %5 = arith.addf %2, %4 : vector<256x256xf32>
    %cst_5 = arith.constant 0.000000e+00 : f32
    %6 = vector.broadcast %cst_5 : f32 to vector<256x256xf32>
    %7 = arith.maximumf %5, %6 : vector<256x256xf32>
    %8 = arith.truncf %7 : vector<256x256xf32> to vector<256x256xbf16>
    %c0_6 = arith.constant 0 : index
    %c0_7 = arith.constant 0 : index
    %9 = vector.load %arg4[%c0_6, %c0_7] : memref<256x256xbf16, #tpu.memory_space<vmem>>, vector<256x256xbf16>
    %cst_8 = arith.constant dense<0.000000e+00> : vector<256x256xf32>
    %10 = tpu.matmul %8, %9, %cst_8 {dimension_numbers = #tpu.dot_dimension_numbers<[1], [0], [0], [1], [0, 0, 1, 1], [], []>} : vector<256x256xbf16>, vector<256x256xbf16>, vector<256x256xf32> -> vector<256x256xf32>
    %c0_9 = arith.constant 0 : index
    %c0_10 = arith.constant 0 : index
    %11 = vector.load %arg5[%c0_9, %c0_10] : memref<1x256xf32, #tpu.memory_space<vmem>>, vector<1x256xf32>
    %12 = vector.broadcast %11 : vector<1x256xf32> to vector<256x256xf32>
    %13 = arith.addf %10, %12 : vector<256x256xf32>
    %cst_11 = arith.constant 0.000000e+00 : f32
    %14 = vector.broadcast %cst_11 : f32 to vector<256x256xf32>
    %15 = arith.maximumf %13, %14 : vector<256x256xf32>
    %16 = arith.truncf %15 : vector<256x256xf32> to vector<256x256xbf16>
    %c0_12 = arith.constant 0 : index
    %c0_13 = arith.constant 0 : index
    %17 = vector.load %arg6[%c0_12, %c0_13] : memref<1x256xbf16, #tpu.memory_space<vmem>>, vector<1x256xbf16>
    %cst_14 = arith.constant dense<0.000000e+00> : vector<1x256xf32>
    %18 = tpu.matmul %17, %16, %cst_14 {dimension_numbers = #tpu.dot_dimension_numbers<[1], [1], [0], [0], [0, 0, 1, 0], [], []>} : vector<1x256xbf16>, vector<256x256xbf16>, vector<1x256xf32> -> vector<1x256xf32>
    %c0_15 = arith.constant 0 : index
    %19 = memref.load %arg7[%c0_15] : memref<1xf32, #tpu.memory_space<smem>>
    %20 = vector.broadcast %19 : f32 to vector<1x256xf32>
    %21 = arith.addf %18, %20 : vector<1x256xf32>
    %c0_16 = arith.constant 0 : index
    %c0_17 = arith.constant 0 : index
    %c0_18 = arith.constant 0 : index
    %22 = vector.load %arg8[%c0_16, %c0_17, %c0_18] : memref<1x1x256xf32, #tpu.memory_space<vmem>>, vector<1x1x256xf32>
    %23 = vector.shape_cast %22 : vector<1x1x256xf32> to vector<1x256xf32>
    %24 = vector.shape_cast %21 : vector<1x256xf32> to vector<1x1x256xf32>
    tpu.vector_store %arg8[%c0_16, %c0_17, %c0_18], %24 {strides = array<i32>} : memref<1x1x256xf32, #tpu.memory_space<vmem>>, vector<1x1x256xf32>,
    return
  }
  func.func @transform_0(%arg0: i32) -> (i32, i32) {
    %c0_i32 = arith.constant 0 : i32
    %c0_i32_0 = arith.constant 0 : i32
    return %arg0, %c0_i32 : i32, i32
  }
  func.func @transform_1(%arg0: i32) -> (i32, i32) {
    %c0_i32 = arith.constant 0 : i32
    %c0_i32_0 = arith.constant 0 : i32
    %c0_i32_1 = arith.constant 0 : i32
    return %c0_i32, %c0_i32_0 : i32, i32
  }
  func.func @transform_2(%arg0: i32) -> (i32, i32) {
    %c0_i32 = arith.constant 0 : i32
    %c0_i32_0 = arith.constant 0 : i32
    %c0_i32_1 = arith.constant 0 : i32
    return %c0_i32, %c0_i32_0 : i32, i32
  }
  func.func @transform_3(%arg0: i32) -> (i32, i32) {
    %c0_i32 = arith.constant 0 : i32
    %c0_i32_0 = arith.constant 0 : i32
    %c0_i32_1 = arith.constant 0 : i32
    return %c0_i32, %c0_i32_0 : i32, i32
  }
  func.func @transform_4(%arg0: i32) -> (i32, i32) {
    %c0_i32 = arith.constant 0 : i32
    %c0_i32_0 = arith.constant 0 : i32
    %c0_i32_1 = arith.constant 0 : i32
    return %c0_i32, %c0_i32_0 : i32, i32
  }
  func.func @transform_5(%arg0: i32) -> (i32, i32) {
    %c0_i32 = arith.constant 0 : i32
    %c0_i32_0 = arith.constant 0 : i32
    %c0_i32_1 = arith.constant 0 : i32
    return %c0_i32, %c0_i32_0 : i32, i32
  }
  func.func @transform_6(%arg0: i32) -> i32 {
    %c0_i32 = arith.constant 0 : i32
    %c0_i32_0 = arith.constant 0 : i32
    return %c0_i32 : i32
  }
  func.func @transform_7(%arg0: i32) -> (i32, i32, i32) {
    %c0_i32 = arith.constant 0 : i32
    %c0_i32_0 = arith.constant 0 : i32
    %c0_i32_1 = arith.constant 0 : i32
    return %arg0, %c0_i32, %c0_i32_0 : i32, i32, i32
  }
}

</mosaic_0001>

<llo_original>
// kernel: tpu_custom_call.1
$region0: #{tpu_custom_call.1}
  #allocation0 [shape = 'u32[]', space=smem, size = 0x4, offset = 0x4, fixed_abs, tag = 'smem constant byte address 0x4 - core index']
  #allocation1 [shape = 'u32[144,128]{1,0:T(1,128)}', space=vmem, size = 0x12000, scoped, tag = 'internal scratch']
  #allocation2 [shape = 'f32[1]{0:T(128)S(6)}', space=smem, size = 0x200, scoped, tag = 'scoped memory for tpu_custom_call.1']
  %s0 = inlined_call_operand.vmem [shape: bf16[512,32], index: 0, kind: input, shape index: {}]
  %s1 = inlined_call_operand.vmem [shape: bf16[32,256], index: 1, kind: input, shape index: {}]
  %s2 = inlined_call_operand.vmem [shape: f32[1,256], index: 2, kind: input, shape index: {}]
  %s3 = inlined_call_operand.vmem [shape: bf16[256,256], index: 3, kind: input, shape index: {}]
  %s4 = inlined_call_operand.vmem [shape: f32[1,256], index: 4, kind: input, shape index: {}]
  %s5 = inlined_call_operand.vmem [shape: bf16[1,256], index: 5, kind: input, shape index: {}]
  %s6 = inlined_call_operand.<no memory space> [shape: f32[1], index: 6, kind: input, shape index: {}]
  %s7 = inlined_call_operand.hbm [shape: f32[2,1,256], index: 7, kind: output, shape index: {}]
  %s8 = sld [smem:[#allocation0]]
  $region61: #{tpu_custom_call.1} parent=0
    _
  %s10 = ssub.s32 1, %s8
  %s11 = scalar_select 0, %s10, %s8
  %12 = sst [smem:[#allocation2]] %s6
  $region1: #{tpu_custom_call.1} parent=0
    #allocation3 [shape = 'u8[2048]{0}', space=vmem, size = 0x800, scoped, tag = 'output window, operand 0']
    #allocation4 [shape = 's32[2]{0}', space=sflag, size = 0x8, scoped, tag = 'scoped memory for tpu_custom_call.1']
    %13 = vsyncpa [#allocation4], 0
    %s14 = scalar_lea.sflag [#allocation4], 1
    %15 = vsyncpa %s14, 0
    loop: start=0, step=1, limit=4
    $region2: #{tpu_custom_call.1} parent=1 // loop_pre_header
      _
    $region3: #{tpu_custom_call.1} parent=1 // loop_header
      %s17 = sphi 0, %s21
      %p18 = scmp.ge.s32.totalorder %s17, 4
      %s27 = sphi 0, %s29
      %s30 = sphi 0, %s27
      %s31 = sphi 0, %s30
      %s47 = sphi 0, %s31
      %s51 = sphi 0, %s51
      %s53 = sphi 0, %s51
      %s54 = sphi 0, %s53
      %s68 = sphi 0, %s54
      %s72 = sphi 0, %s72
      %s74 = sphi 0, %s72
      %s75 = sphi 0, %s74
      %s89 = sphi 0, %s75
      %s93 = sphi 0, %s93
      %s95 = sphi 0, %s93
      %s96 = sphi 0, %s95
      %s110 = sphi 0, %s96
      %s114 = sphi 0, %s114
      %s116 = sphi 0, %s114
      %s117 = sphi 0, %s116
      %s131 = sphi 0, %s117
      %s135 = sphi 0, %s135
      %s137 = sphi 0, %s135
      %s138 = sphi 0, %s137
      %s152 = sphi 0, %s138
      %s156 = sphi 0, %s156
      %s158 = sphi 0, %s156
      %s159 = sphi 0, %s158
      %s173 = sphi 0, %s159
      %s179 = sphi 0, %s181
      %s182 = sphi 0, %s179
      %s183 = sphi 0, %s182
      %s199 = sphi 0, %s183
    $region4: #{tpu_custom_call.1} parent=1 // loop_header_branch
      %20 = sbr.rel (%p18) target = $region8
    $region5: #{tpu_custom_call.1} parent=1 // loop_body
      %s22 = ssub.s32 %s17, 1
      %s23 = ssub.s32 %s17, 2
      %s24 = sadd.s32 %s17, 1
      %s25 = ssub.s32 %s17, %s24
      %p26 = scmp.eq.s32.totalorder %s25, 0
      %s28 = sadd.s32 %s27, 1
      %s29 = scalar_select %p26, %s27, %s28
      %p32 = pneg %p26
      %p33 = scmp.eq.s32.totalorder %s17, 1
      %p34 = por %p32, %p33
      %p35 = scmp.ne.s32.totalorder %s27, %s30
      %p36 = scmp.eq.s32.totalorder %s17, 0
      %p37 = por %p35, %p36
      %p38 = scmp.ne.s32.totalorder %s27, %s30
      %p39 = scmp.eq.s32.totalorder %s22, 1
      %p40 = por %p38, %p39
      %p41 = scmp.ne.s32.totalorder %s30, %s31
      %p42 = scmp.eq.s32.totalorder %s22, 0
      %p43 = por %p41, %p42
      %p44 = scmp.ne.s32.totalorder %s30, %s31
      %p45 = scmp.eq.s32.totalorder %s23, 1
      %p46 = por %p44, %p45
      %p48 = scmp.ne.s32.totalorder %s31, %s47
      %p49 = scmp.eq.s32.totalorder %s23, 0
      %p50 = por %p48, %p49
      %s52 = sadd.s32 %s51, 1
      %p55 = scmp.eq.s32.totalorder %s17, 1
      %p56 = scmp.ne.s32.totalorder %s51, %s53
      %p57 = scmp.eq.s32.totalorder %s17, 0
      %p58 = por %p56, %p57
      %p59 = scmp.ne.s32.totalorder %s51, %s53
      %p60 = scmp.eq.s32.totalorder %s22, 1
      %p61 = por %p59, %p60
      %p62 = scmp.ne.s32.totalorder %s53, %s54
      %p63 = scmp.eq.s32.totalorder %s22, 0
      %p64 = por %p62, %p63
      %p65 = scmp.ne.s32.totalorder %s53, %s54
      %p66 = scmp.eq.s32.totalorder %s23, 1
      %p67 = por %p65, %p66
      %p69 = scmp.ne.s32.totalorder %s54, %s68
      %p70 = scmp.eq.s32.totalorder %s23, 0
      %p71 = por %p69, %p70
      %s73 = sadd.s32 %s72, 1
      %p76 = scmp.eq.s32.totalorder %s17, 1
      %p77 = scmp.ne.s32.totalorder %s72, %s74
      %p78 = scmp.eq.s32.totalorder %s17, 0
      %p79 = por %p77, %p78
      %p80 = scmp.ne.s32.totalorder %s72, %s74
      %p81 = scmp.eq.s32.totalorder %s22, 1
      %p82 = por %p80, %p81
      %p83 = scmp.ne.s32.totalorder %s74, %s75
      %p84 = scmp.eq.s32.totalorder %s22, 0
      %p85 = por %p83, %p84
      %p86 = scmp.ne.s32.totalorder %s74, %s75
      %p87 = scmp.eq.s32.totalorder %s23, 1
      %p88 = por %p86, %p87
      %p90 = scmp.ne.s32.totalorder %s75, %s89
      %p91 = scmp.eq.s32.totalorder %s23, 0
      %p92 = por %p90, %p91
      %s94 = sadd.s32 %s93, 1
      %p97 = scmp.eq.s32.totalorder %s17, 1
      %p98 = scmp.ne.s32.totalorder %s93, %s95
      %p99 = scmp.eq.s32.totalorder %s17, 0
      %p100 = por %p98, %p99
      %p101 = scmp.ne.s32.totalorder %s93, %s95
      %p102 = scmp.eq.s32.totalorder %s22, 1
      %p103 = por %p101, %p102
      %p104 = scmp.ne.s32.totalorder %s95, %s96
      %p105 = scmp.eq.s32.totalorder %s22, 0
      %p106 = por %p104, %p105
      %p107 = scmp.ne.s32.totalorder %s95, %s96
      %p108 = scmp.eq.s32.totalorder %s23, 1
      %p109 = por %p107, %p108
      %p111 = scmp.ne.s32.totalorder %s96, %s110
      %p112 = scmp.eq.s32.totalorder %s23, 0
      %p113 = por %p111, %p112
      %s115 = sadd.s32 %s114, 1
      %p118 = scmp.eq.s32.totalorder %s17, 1
      %p119 = scmp.ne.s32.totalorder %s114, %s116
      %p120 = scmp.eq.s32.totalorder %s17, 0
      %p121 = por %p119, %p120
      %p122 = scmp.ne.s32.totalorder %s114, %s116
      %p123 = scmp.eq.s32.totalorder %s22, 1
      %p124 = por %p122, %p123
      %p125 = scmp.ne.s32.totalorder %s116, %s117
      %p126 = scmp.eq.s32.totalorder %s22, 0
      %p127 = por %p125, %p126
      %p128 = scmp.ne.s32.totalorder %s116, %s117
      %p129 = scmp.eq.s32.totalorder %s23, 1
      %p130 = por %p128, %p129
      %p132 = scmp.ne.s32.totalorder %s117, %s131
      %p133 = scmp.eq.s32.totalorder %s23, 0
      %p134 = por %p132, %p133
      %s136 = sadd.s32 %s135, 1
      %p139 = scmp.eq.s32.totalorder %s17, 1
      %p140 = scmp.ne.s32.totalorder %s135, %s137
      %p141 = scmp.eq.s32.totalorder %s17, 0
      %p142 = por %p140, %p141
      %p143 = scmp.ne.s32.totalorder %s135, %s137
      %p144 = scmp.eq.s32.totalorder %s22, 1
      %p145 = por %p143, %p144
      %p146 = scmp.ne.s32.totalorder %s137, %s138
      %p147 = scmp.eq.s32.totalorder %s22, 0
      %p148 = por %p146, %p147
      %p149 = scmp.ne.s32.totalorder %s137, %s138
      %p150 = scmp.eq.s32.totalorder %s23, 1
      %p151 = por %p149, %p150
      %p153 = scmp.ne.s32.totalorder %s138, %s152
      %p154 = scmp.eq.s32.totalorder %s23, 0
      %p155 = por %p153, %p154
      %s157 = sadd.s32 %s156, 1
      %p160 = scmp.eq.s32.totalorder %s17, 1
      %p161 = scmp.ne.s32.totalorder %s156, %s158
      %p162 = scmp.eq.s32.totalorder %s17, 0
      %p163 = por %p161, %p162
      %p164 = scmp.ne.s32.totalorder %s156, %s158
      %p165 = scmp.eq.s32.totalorder %s22, 1
      %p166 = por %p164, %p165
      %p167 = scmp.ne.s32.totalorder %s158, %s159
      %p168 = scmp.eq.s32.totalorder %s22, 0
      %p169 = por %p167, %p168
      %p170 = scmp.ne.s32.totalorder %s158, %s159
      %p171 = scmp.eq.s32.totalorder %s23, 1
      %p172 = por %p170, %p171
      %p174 = scmp.ne.s32.totalorder %s159, %s173
      %p175 = scmp.eq.s32.totalorder %s23, 0
      %p176 = por %p174, %p175
      %s177 = ssub.s32 %s17, %s24
      %p178 = scmp.eq.s32.totalorder %s177, 0
      %s180 = sadd.s32 %s179, 1
      %s181 = scalar_select %p178, %s179, %s180
      %p184 = pneg %p178
      %p185 = scmp.eq.s32.totalorder %s17, 1
      %p186 = por %p184, %p185
      %p187 = scmp.ne.s32.totalorder %s179, %s182
      %p188 = scmp.eq.s32.totalorder %s17, 0
      %p189 = por %p187, %p188
      %p190 = scmp.ne.s32.totalorder %s179, %s182
      %p191 = scmp.eq.s32.totalorder %s22, 1
      %p192 = por %p190, %p191
      %p193 = scmp.ne.s32.totalorder %s182, %s183
      %p194 = scmp.eq.s32.totalorder %s22, 0
      %p195 = por %p193, %p194
      %p196 = scmp.ne.s32.totalorder %s182, %s183
      %p197 = scmp.eq.s32.totalorder %s23, 1
      %p198 = por %p196, %p197
      %p200 = scmp.ne.s32.totalorder %s183, %s199
      %p201 = scmp.eq.s32.totalorder %s23, 0
      %p202 = por %p200, %p201
      %p203 = scmp.le.s32.totalorder 1, %s17
      %p204 = scmp.lt.s32.totalorder %s17, 3
      %p205 = pnand %p203, %p204
      %p206 = pneg %p205
      // Predicated region
      $region9: #{tpu_custom_call.1} parent=5 // pred_check
        _
      $region10: #{tpu_custom_call.1} parent=5 // pred_check_branch
        %208 = sbr.rel (%p205) target = $region12
      $region11: #{tpu_custom_call.1} parent=5 // pred_region
        %s209 = ssub.s32 %s17, 1
        // Predicated region
        $region13: #{tpu_custom_call.1} parent=11 // pred_check
          %p210 = pneg %p64
        $region14: #{tpu_custom_call.1} parent=11 // pred_check_branch
          %212 = sbr.rel (%p210) target = $region16
        $region15: #{tpu_custom_call.1} parent=11 // pred_region
          _
        $region16: #{tpu_custom_call.1} parent=11 // pred_fallthru
          _
        // Predicated region
        $region17: #{tpu_custom_call.1} parent=11 // pred_check
          %p213 = pneg %p85
        $region18: #{tpu_custom_call.1} parent=11 // pred_check_branch
          %215 = sbr.rel (%p213) target = $region20
        $region19: #{tpu_custom_call.1} parent=11 // pred_region
          _
        $region20: #{tpu_custom_call.1} parent=11 // pred_fallthru
          _
        // Predicated region
        $region21: #{tpu_custom_call.1} parent=11 // pred_check
          %p216 = pneg %p106
        $region22: #{tpu_custom_call.1} parent=11 // pred_check_branch
          %218 = sbr.rel (%p216) target = $region24
        $region23: #{tpu_custom_call.1} parent=11 // pred_region
          _
        $region24: #{tpu_custom_call.1} parent=11 // pred_fallthru
          _
        // Predicated region
        $region25: #{tpu_custom_call.1} parent=11 // pred_check
          %p219 = pneg %p127
        $region26: #{tpu_custom_call.1} parent=11 // pred_check_branch
          %221 = sbr.rel (%p219) target = $region28
        $region27: #{tpu_custom_call.1} parent=11 // pred_region
          _
        $region28: #{tpu_custom_call.1} parent=11 // pred_fallthru
          _
        // Predicated region
        $region29: #{tpu_custom_call.1} parent=11 // pred_check
          %p222 = pneg %p148
        $region30: #{tpu_custom_call.1} parent=11 // pred_check_branch
          %224 = sbr.rel (%p222) target = $region32
        $region31: #{tpu_custom_call.1} parent=11 // pred_region
          _
        $region32: #{tpu_custom_call.1} parent=11 // pred_fallthru
          _
        // Predicated region
        $region33: #{tpu_custom_call.1} parent=11 // pred_check
          %p225 = pneg %p169
        $region34: #{tpu_custom_call.1} parent=11 // pred_check_branch
          %227 = sbr.rel (%p225) target = $region36
        $region35: #{tpu_custom_call.1} parent=11 // pred_region
          _
        $region36: #{tpu_custom_call.1} parent=11 // pred_fallthru
          _
      $region12: #{tpu_custom_call.1} parent=5 // pred_fallthru
        _
      %p228 = scmp.lt.s32.totalorder %s17, 2
      // Predicated region
      $region37: #{tpu_custom_call.1} parent=5 // pred_check
        %p229 = pneg %p228
      $region38: #{tpu_custom_call.1} parent=5 // pred_check_branch
        %231 = sbr.rel (%p229) target = $region40
      $region39: #{tpu_custom_call.1} parent=5 // pred_region
        // Predicated region
        $region41: #{tpu_custom_call.1} parent=39 // pred_check
          %p232 = pneg %p37
        $region42: #{tpu_custom_call.1} parent=39 // pred_check_branch
          %234 = sbr.rel (%p232) target = $region44
        $region43: #{tpu_custom_call.1} parent=39 // pred_region
          %s235 = smul.u32 32, %s17
          %p236 = scmp.lt.s32.totalorder %s235, 63
          %s237 = scalar_select %p236, %s235, 63
          %s238 = smul.addr %s237, 4
          %s239 = scalar_lea.vmem %s0, %s238
          %s240 = smul.u32 32, %s17
        $region44: #{tpu_custom_call.1} parent=39 // pred_fallthru
          _
      $region40: #{tpu_custom_call.1} parent=5 // pred_fallthru
        _
      %p241 = scmp.le.s32.totalorder 1, %s17
      %p242 = scmp.lt.s32.totalorder %s17, 3
      %p243 = pnand %p241, %p242
      %p244 = pneg %p243
      // Predicated region
      $region45: #{tpu_custom_call.1} parent=5 // pred_check
        _
      $region46: #{tpu_custom_call.1} parent=5 // pred_check_branch
        %246 = sbr.rel (%p243) target = $region48
      $region47: #{tpu_custom_call.1} parent=5 // pred_region
        %s247 = ssub.s32 %s17, 1
        %s248 = smul.u32 32, %s22
        %p249 = scmp.lt.s32.totalorder %s248, 63
        %s250 = scalar_select %p249, %s248, 63
        %s251 = smul.addr %s250, 4
        %s252 = scalar_lea.vmem %s0, %s251
        %p253 = pneg %p43
        %p254 = pneg %p40
        %p255 = pneg %p64
        %p256 = pneg %p61
        %p257 = pneg %p85
        %p258 = pneg %p82
        %p259 = pneg %p106
        %p260 = pneg %p103
        %p261 = pneg %p127
        %p262 = pneg %p124
        %p263 = pneg %p148
        %p264 = pneg %p145
        %p265 = pneg %p169
        %p266 = pneg %p166
        %p267 = pneg %p195
        %p268 = pneg %p192
        %s269 = sand.u32 %s182, 1
        %s270 = scalar_lea.sflag [#allocation4], %s269
        %s271 = sand.u32 %s182, 1
        %s272 = smul.addr %s271, 2
        %s273 = scalar_lea.vmem [#allocation3], %s272
        %s274 = smul.u32 32, %s22
        %p275 = scmp.lt.s32.totalorder %s274, 63
        %s276 = scalar_select %p275, %s274, 63
        %s277 = smul.addr %s276, 4
        %s278 = scalar_lea.vmem %s0, %s277
        %s279 = smul.u32 32, %s22
        %v281 = vld [vmem:[%s278] sm:$0xf]
        %v282 = vld [vmem:[%s278 + $0x4] sm:$0xf]
        %v283 = vld [vmem:[%s278 + $0x8] sm:$0xf]
        %v284 = vld [vmem:[%s278 + $0xc] sm:$0xf]
        %v285 = vld [vmem:[%s278 + $0x10] sm:$0xf]
        %v286 = vld [vmem:[%s278 + $0x14] sm:$0xf]
        %v287 = vld [vmem:[%s278 + $0x18] sm:$0xf]
        %v288 = vld [vmem:[%s278 + $0x1c] sm:$0xf]
        %v289 = vld [vmem:[%s278 + $0x20] sm:$0xf]
        %v290 = vld [vmem:[%s278 + $0x24] sm:$0xf]
        %v291 = vld [vmem:[%s278 + $0x28] sm:$0xf]
        %v292 = vld [vmem:[%s278 + $0x2c] sm:$0xf]
        %v293 = vld [vmem:[%s278 + $0x30] sm:$0xf]
        %v294 = vld [vmem:[%s278 + $0x34] sm:$0xf]
        %v295 = vld [vmem:[%s278 + $0x38] sm:$0xf]
        %v296 = vld [vmem:[%s278 + $0x3c] sm:$0xf]
        %v297 = vld [vmem:[%s278 + $0x40] sm:$0xf]
        %v298 = vld [vmem:[%s278 + $0x44] sm:$0xf]
        %v299 = vld [vmem:[%s278 + $0x48] sm:$0xf]
        %v300 = vld [vmem:[%s278 + $0x4c] sm:$0xf]
        %v301 = vld [vmem:[%s278 + $0x50] sm:$0xf]
        %v302 = vld [vmem:[%s278 + $0x54] sm:$0xf]
        %v303 = vld [vmem:[%s278 + $0x58] sm:$0xf]
        %v304 = vld [vmem:[%s278 + $0x5c] sm:$0xf]
        %v305 = vld [vmem:[%s278 + $0x60] sm:$0xf]
        %v306 = vld [vmem:[%s278 + $0x64] sm:$0xf]
        %v307 = vld [vmem:[%s278 + $0x68] sm:$0xf]
        %v308 = vld [vmem:[%s278 + $0x6c] sm:$0xf]
        %v309 = vld [vmem:[%s278 + $0x70] sm:$0xf]
        %v310 = vld [vmem:[%s278 + $0x74] sm:$0xf]
        %v311 = vld [vmem:[%s278 + $0x78] sm:$0xf]
        %v312 = vld [vmem:[%s278 + $0x7c] sm:$0xf]
        %v313 = vld [vmem:[%s1] sm:$0xff]
        %v314 = vld [vmem:[%s1 + $0x8] sm:$0xff]
        %v315 = vld [vmem:[%s1 + $0x10] sm:$0xff]
        %v316 = vld [vmem:[%s1 + $0x18] sm:$0xff]
        %v317 = vld [vmem:[%s2] sm:$0x3]
        %v319 = vlaneseq
        %v320 = vshrl.u32 %v319, 7
        %v321 = vsub.s32 0, %v320
        %v322 = vrot.slane %v317, %v321
        %v323 = vlaneseq
        %v324 = vshrl.u32 %v323, 7
        %v325 = vsub.s32 1, %v324
        %v326 = vrot.slane %v317, %v325
        %v361 = vunpack.c.l.b16 %v281
        %v362 = vunpack.c.l.b16 %v282
        %v363 = vunpack.c.l.b16 %v283
        %v364 = vunpack.c.l.b16 %v284
        %v365 = vunpack.c.l.b16 %v285
        %v366 = vunpack.c.l.b16 %v286
        %v367 = vunpack.c.l.b16 %v287
        %v368 = vunpack.c.l.b16 %v288
        %v369 = vunpack.c.l.b16 %v289
        %v370 = vunpack.c.l.b16 %v290
        %v371 = vunpack.c.l.b16 %v291
        %v372 = vunpack.c.l.b16 %v292
        %v373 = vunpack.c.l.b16 %v293
        %v374 = vunpack.c.l.b16 %v294
        %v375 = vunpack.c.l.b16 %v295
        %v376 = vunpack.c.l.b16 %v296
        %v377 = vunpack.c.l.b16 %v297
        %v378 = vunpack.c.l.b16 %v298
        %v379 = vunpack.c.l.b16 %v299
        %v380 = vunpack.c.l.b16 %v300
        %v381 = vunpack.c.l.b16 %v301
        %v382 = vunpack.c.l.b16 %v302
        %v383 = vunpack.c.l.b16 %v303
        %v384 = vunpack.c.l.b16 %v304
        %v385 = vunpack.c.l.b16 %v305
        %v386 = vunpack.c.l.b16 %v306
        %v387 = vunpack.c.l.b16 %v307
        %v388 = vunpack.c.l.b16 %v308
        %v389 = vunpack.c.l.b16 %v309
        %v390 = vunpack.c.l.b16 %v310
        %v391 = vunpack.c.l.b16 %v311
        %v392 = vunpack.c.l.b16 %v312
        %v393 = vpack.c.b16 %v362, %v361
        %v394 = vpack.c.b16 %v364, %v363
        %v395 = vpack.c.b16 %v366, %v365
        %v396 = vpack.c.b16 %v368, %v367
        %v397 = vpack.c.b16 %v370, %v369
        %v398 = vpack.c.b16 %v372, %v371
        %v399 = vpack.c.b16 %v374, %v373
        %v400 = vpack.c.b16 %v376, %v375
        %v401 = vpack.c.b16 %v378, %v377
        %v402 = vpack.c.b16 %v380, %v379
        %v403 = vpack.c.b16 %v382, %v381
        %v404 = vpack.c.b16 %v384, %v383
        %v405 = vpack.c.b16 %v386, %v385
        %v406 = vpack.c.b16 %v388, %v387
        %v407 = vpack.c.b16 %v390, %v389
        %v408 = vpack.c.b16 %v392, %v391
        %v413 = vunpack.c.l.b16 %v313
        %v414 = vunpack.c.h.b16 %v313
        %v415 = vunpack.c.l.b16 %v314
        %v416 = vunpack.c.h.b16 %v314
        %v417 = vunpack.c.l.b16 %v315
        %v418 = vunpack.c.h.b16 %v315
        %v419 = vunpack.c.l.b16 %v316
        %v420 = vunpack.c.h.b16 %v316
        %v421 = vpack.c.b16 %v415, %v413
        %v422 = vpack.c.b16 %v416, %v414
        %v423 = vpack.c.b16 %v419, %v417
        %v424 = vpack.c.b16 %v420, %v418
        %vm429 = vcmask 261120
        %v431 = vsel %vm429, %v393, 0
        %v434 = vsel %vm429, %v394, 0
        %v437 = vsel %vm429, %v395, 0
        %v440 = vsel %vm429, %v396, 0
        %v443 = vsel %vm429, %v397, 0
        %v446 = vsel %vm429, %v398, 0
        %v449 = vsel %vm429, %v399, 0
        %v452 = vsel %vm429, %v400, 0
        %v455 = vsel %vm429, %v401, 0
        %v458 = vsel %vm429, %v402, 0
        %v461 = vsel %vm429, %v403, 0
        %v464 = vsel %vm429, %v404, 0
        %v467 = vsel %vm429, %v405, 0
        %v470 = vsel %vm429, %v406, 0
        %v473 = vsel %vm429, %v407, 0
        %v476 = vsel %vm429, %v408, 0
        %478 = vmatprep.subr.bf16.mxu0 %v422
        %479 = vmatpush1.bf16.msra.mxu0 %v421
        %480 = vmatprep.subr.bf16.mxu0 %v424
        %481 = vmatpush1.bf16.msra.mxu0 %v423
        %482 = vmatprep.subr.bf16.mxu0 0
        %483 = vmatpush1.bf16.msra.mxu0 0
        %484 = vmatprep.subr.bf16.mxu0 0
        %485 = vmatpush1.bf16.msra.mxu0 0
        %486 = vmatprep.subr.bf16.mxu0 0
        %487 = vmatpush1.bf16.msra.mxu0 0
        %488 = vmatprep.subr.bf16.mxu0 0
        %489 = vmatpush1.bf16.msra.mxu0 0
        %490 = vmatprep.subr.bf16.mxu0 0
        %491 = vmatpush1.bf16.msra.mxu0 0
        %492 = vmatprep.subr.bf16.mxu0 0
        %493 = vmatpush1.bf16.msra.mxu0 0
        %494 = vmatprep.subr.bf16.mxu0 0
        %495 = vmatpush1.bf16.msra.mxu0 0
        %496 = vmatprep.subr.bf16.mxu0 0
        %497 = vmatpush1.bf16.msra.mxu0 0
        %498 = vmatprep.subr.bf16.mxu0 0
        %499 = vmatpush1.bf16.msra.mxu0 0
        %500 = vmatprep.subr.bf16.mxu0 0
        %501 = vmatpush1.bf16.msra.mxu0 0
        %502 = vmatprep.subr.bf16.mxu0 0
        %503 = vmatpush1.bf16.msra.mxu0 0
        %504 = vmatprep.subr.bf16.mxu0 0
        %505 = vmatpush1.bf16.msra.mxu0 0
        %506 = vmatprep.subr.bf16.mxu0 0
        %507 = vmatpush1.bf16.msra.mxu0 0
        %508 = vmatprep.subr.bf16.mxu0 0
        %509 = vmatpush1.bf16.msra.mxu0 0
        %510 = vmatprep.mubr.bf16.mxu0 0
        %511 = vmatmul.mubr.bf16.gmra.mrb[0].mxu0 %v431
        %v512 = vpop.f32.mrb[0].mxu0
        %v513 = vadd.f32 %v322, %v512
        %v514 = vpop.f32.mrb[0].mxu0
        %v515 = vadd.f32 %v326, %v514
        %v516 = vpop.f32.mrb[0].mxu0
        %v517 = vadd.f32 %v322, %v516
        %v518 = vpop.f32.mrb[0].mxu0
        %v519 = vadd.f32 %v326, %v518
        %520 = vmatprep.mubr.bf16.mxu0 0
        %521 = vmatmul.mubr.bf16.gmra.mrb[0].mxu0 %v434
        %v522 = vpop.f32.mrb[0].mxu0
        %v523 = vadd.f32 %v322, %v522
        %v524 = vpop.f32.mrb[0].mxu0
        %v525 = vadd.f32 %v326, %v524
        %v526 = vpop.f32.mrb[0].mxu0
        %v527 = vadd.f32 %v322, %v526
        %v528 = vpop.f32.mrb[0].mxu0
        %v529 = vadd.f32 %v326, %v528
        %530 = vmatprep.mubr.bf16.mxu0 0
        %531 = vmatmul.mubr.bf16.gmra.mrb[0].mxu0 %v437
        %v532 = vpop.f32.mrb[0].mxu0
        %v533 = vadd.f32 %v322, %v532
        %v534 = vpop.f32.mrb[0].mxu0
        %v535 = vadd.f32 %v326, %v534
        %v536 = vpop.f32.mrb[0].mxu0
        %v537 = vadd.f32 %v322, %v536
        %v538 = vpop.f32.mrb[0].mxu0
        %v539 = vadd.f32 %v326, %v538
        %540 = vmatprep.mubr.bf16.mxu0 0
        %541 = vmatmul.mubr.bf16.gmra.mrb[0].mxu0 %v440
        %v542 = vpop.f32.mrb[0].mxu0
        %v543 = vadd.f32 %v322, %v542
        %v544 = vpop.f32.mrb[0].mxu0
        %v545 = vadd.f32 %v326, %v544
        %v546 = vpop.f32.mrb[0].mxu0
        %v547 = vadd.f32 %v322, %v546
        %v548 = vpop.f32.mrb[0].mxu0
        %v549 = vadd.f32 %v326, %v548
        %550 = vmatprep.mubr.bf16.mxu0 0
        %551 = vmatmul.mubr.bf16.gmra.mrb[0].mxu0 %v443
        %v552 = vpop.f32.mrb[0].mxu0
        %v553 = vadd.f32 %v322, %v552
        %v554 = vpop.f32.mrb[0].mxu0
        %v555 = vadd.f32 %v326, %v554
        %v556 = vpop.f32.mrb[0].mxu0
        %v557 = vadd.f32 %v322, %v556
        %v558 = vpop.f32.mrb[0].mxu0
        %v559 = vadd.f32 %v326, %v558
        %560 = vmatprep.mubr.bf16.mxu0 0
        %561 = vmatmul.mubr.bf16.gmra.mrb[0].mxu0 %v446
        %v562 = vpop.f32.mrb[0].mxu0
        %v563 = vadd.f32 %v322, %v562
        %v564 = vpop.f32.mrb[0].mxu0
        %v565 = vadd.f32 %v326, %v564
        %v566 = vpop.f32.mrb[0].mxu0
        %v567 = vadd.f32 %v322, %v566
        %v568 = vpop.f32.mrb[0].mxu0
        %v569 = vadd.f32 %v326, %v568
        %570 = vmatprep.mubr.bf16.mxu0 0
        %571 = vmatmul.mubr.bf16.gmra.mrb[0].mxu0 %v449
        %v572 = vpop.f32.mrb[0].mxu0
        %v573 = vadd.f32 %v322, %v572
        %v574 = vpop.f32.mrb[0].mxu0
        %v575 = vadd.f32 %v326, %v574
        %v576 = vpop.f32.mrb[0].mxu0
        %v577 = vadd.f32 %v322, %v576
        %v578 = vpop.f32.mrb[0].mxu0
        %v579 = vadd.f32 %v326, %v578
        %580 = vmatprep.mubr.bf16.mxu0 0
        %581 = vmatmul.mubr.bf16.gmra.mrb[0].mxu0 %v452
        %v582 = vpop.f32.mrb[0].mxu0
        %v583 = vadd.f32 %v322, %v582
        %v584 = vpop.f32.mrb[0].mxu0
        %v585 = vadd.f32 %v326, %v584
        %v586 = vpop.f32.mrb[0].mxu0
        %v587 = vadd.f32 %v322, %v586
        %v588 = vpop.f32.mrb[0].mxu0
        %v589 = vadd.f32 %v326, %v588
        %590 = vmatprep.mubr.bf16.mxu0 0
        %591 = vmatmul.mubr.bf16.gmra.mrb[0].mxu0 %v455
        %v592 = vpop.f32.mrb[0].mxu0
        %v593 = vadd.f32 %v322, %v592
        %v594 = vpop.f32.mrb[0].mxu0
        %v595 = vadd.f32 %v326, %v594
        %v596 = vpop.f32.mrb[0].mxu0
        %v597 = vadd.f32 %v322, %v596
        %v598 = vpop.f32.mrb[0].mxu0
        %v599 = vadd.f32 %v326, %v598
        %600 = vmatprep.mubr.bf16.mxu0 0
        %601 = vmatmul.mubr.bf16.gmra.mrb[0].mxu0 %v458
        %v602 = vpop.f32.mrb[0].mxu0
        %v603 = vadd.f32 %v322, %v602
        %v604 = vpop.f32.mrb[0].mxu0
        %v605 = vadd.f32 %v326, %v604
        %v606 = vpop.f32.mrb[0].mxu0
        %v607 = vadd.f32 %v322, %v606
        %v608 = vpop.f32.mrb[0].mxu0
        %v609 = vadd.f32 %v326, %v608
        %610 = vmatprep.mubr.bf16.mxu0 0
        %611 = vmatmul.mubr.bf16.gmra.mrb[0].mxu0 %v461
        %v612 = vpop.f32.mrb[0].mxu0
        %v613 = vadd.f32 %v322, %v612
        %v614 = vpop.f32.mrb[0].mxu0
        %v615 = vadd.f32 %v326, %v614
        %v616 = vpop.f32.mrb[0].mxu0
        %v617 = vadd.f32 %v322, %v616
        %v618 = vpop.f32.mrb[0].mxu0
        %v619 = vadd.f32 %v326, %v618
        %620 = vmatprep.mubr.bf16.mxu0 0
        %621 = vmatmul.mubr.bf16.gmra.mrb[0].mxu0 %v464
        %v622 = vpop.f32.mrb[0].mxu0
        %v623 = vadd.f32 %v322, %v622
        %v624 = vpop.f32.mrb[0].mxu0
        %v625 = vadd.f32 %v326, %v624
        %v626 = vpop.f32.mrb[0].mxu0
        %v627 = vadd.f32 %v322, %v626
        %v628 = vpop.f32.mrb[0].mxu0
        %v629 = vadd.f32 %v326, %v628
        %630 = vmatprep.mubr.bf16.mxu0 0
        %631 = vmatmul.mubr.bf16.gmra.mrb[0].mxu0 %v467
        %v632 = vpop.f32.mrb[0].mxu0
        %v633 = vadd.f32 %v322, %v632
        %v634 = vpop.f32.mrb[0].mxu0
        %v635 = vadd.f32 %v326, %v634
        %v636 = vpop.f32.mrb[0].mxu0
        %v637 = vadd.f32 %v322, %v636
        %v638 = vpop.f32.mrb[0].mxu0
        %v639 = vadd.f32 %v326, %v638
        %640 = vmatprep.mubr.bf16.mxu0 0
        %641 = vmatmul.mubr.bf16.gmra.mrb[0].mxu0 %v470
        %v642 = vpop.f32.mrb[0].mxu0
        %v643 = vadd.f32 %v322, %v642
        %v644 = vpop.f32.mrb[0].mxu0
        %v645 = vadd.f32 %v326, %v644
        %v646 = vpop.f32.mrb[0].mxu0
        %v647 = vadd.f32 %v322, %v646
        %v648 = vpop.f32.mrb[0].mxu0
        %v649 = vadd.f32 %v326, %v648
        %650 = vmatprep.mubr.bf16.mxu0 0
        %651 = vmatmul.mubr.bf16.gmra.mrb[0].mxu0 %v473
        %v652 = vpop.f32.mrb[0].mxu0
        %v653 = vadd.f32 %v322, %v652
        %v654 = vpop.f32.mrb[0].mxu0
        %v655 = vadd.f32 %v326, %v654
        %v656 = vpop.f32.mrb[0].mxu0
        %v657 = vadd.f32 %v322, %v656
        %v658 = vpop.f32.mrb[0].mxu0
        %v659 = vadd.f32 %v326, %v658
        %660 = vmatprep.mubr.bf16.mxu0 0
        %661 = vmatmul.mubr.bf16.gmra.mrb[0].mxu0 %v476
        %v662 = vpop.f32.mrb[0].mxu0
        %v663 = vadd.f32 %v322, %v662
        %v664 = vpop.f32.mrb[0].mxu0
        %v665 = vadd.f32 %v326, %v664
        %v666 = vpop.f32.mrb[0].mxu0
        %v667 = vadd.f32 %v322, %v666
        %v668 = vpop.f32.mrb[0].mxu0
        %v669 = vadd.f32 %v326, %v668
        %670 = vdwg.mxu0
        %v671 = vmax.f32 %v513, 0.0
        %v672 = vmax.f32 %v515, 0.0
        %v673 = vmax.f32 %v517, 0.0
        %v674 = vmax.f32 %v519, 0.0
        %v675 = vmax.f32 %v523, 0.0
        %v676 = vmax.f32 %v525, 0.0
        %v677 = vmax.f32 %v527, 0.0
        %v678 = vmax.f32 %v529, 0.0
        %v679 = vmax.f32 %v533, 0.0
        %v680 = vmax.f32 %v535, 0.0
        %v681 = vmax.f32 %v537, 0.0
        %v682 = vmax.f32 %v539, 0.0
        %v683 = vmax.f32 %v543, 0.0
        %v684 = vmax.f32 %v545, 0.0
        %v685 = vmax.f32 %v547, 0.0
        %v686 = vmax.f32 %v549, 0.0
        %v687 = vmax.f32 %v553, 0.0
        %v688 = vmax.f32 %v555, 0.0
        %v689 = vmax.f32 %v557, 0.0
        %v690 = vmax.f32 %v559, 0.0
        %v691 = vmax.f32 %v563, 0.0
        %v692 = vmax.f32 %v565, 0.0
        %v693 = vmax.f32 %v567, 0.0
        %v694 = vmax.f32 %v569, 0.0
        %v695 = vmax.f32 %v573, 0.0
        %v696 = vmax.f32 %v575, 0.0
        %v697 = vmax.f32 %v577, 0.0
        %v698 = vmax.f32 %v579, 0.0
        %v699 = vmax.f32 %v583, 0.0
        %v700 = vmax.f32 %v585, 0.0
        %v701 = vmax.f32 %v587, 0.0
        %v702 = vmax.f32 %v589, 0.0
        %v703 = vmax.f32 %v593, 0.0
        %v704 = vmax.f32 %v595, 0.0
        %v705 = vmax.f32 %v597, 0.0
        %v706 = vmax.f32 %v599, 0.0
        %v707 = vmax.f32 %v603, 0.0
        %v708 = vmax.f32 %v605, 0.0
        %v709 = vmax.f32 %v607, 0.0
        %v710 = vmax.f32 %v609, 0.0
        %v711 = vmax.f32 %v613, 0.0
        %v712 = vmax.f32 %v615, 0.0
        %v713 = vmax.f32 %v617, 0.0
        %v714 = vmax.f32 %v619, 0.0
        %v715 = vmax.f32 %v623, 0.0
        %v716 = vmax.f32 %v625, 0.0
        %v717 = vmax.f32 %v627, 0.0
        %v718 = vmax.f32 %v629, 0.0
        %v719 = vmax.f32 %v633, 0.0
        %v720 = vmax.f32 %v635, 0.0
        %v721 = vmax.f32 %v637, 0.0
        %v722 = vmax.f32 %v639, 0.0
        %v723 = vmax.f32 %v643, 0.0
        %v724 = vmax.f32 %v645, 0.0
        %v725 = vmax.f32 %v647, 0.0
        %v726 = vmax.f32 %v649, 0.0
        %v727 = vmax.f32 %v653, 0.0
        %v728 = vmax.f32 %v655, 0.0
        %v729 = vmax.f32 %v657, 0.0
        %v730 = vmax.f32 %v659, 0.0
        %v731 = vmax.f32 %v663, 0.0
        %v732 = vmax.f32 %v665, 0.0
        %v733 = vmax.f32 %v667, 0.0
        %v734 = vmax.f32 %v669, 0.0
        %v735 = vpack.c.bf16 %v673, %v671
        %v736 = vpack.c.bf16 %v674, %v672
        %v737 = vpack.c.bf16 %v677, %v675
        %v738 = vpack.c.bf16 %v678, %v676
        %v739 = vpack.c.bf16 %v681, %v679
        %v740 = vpack.c.bf16 %v682, %v680
        %v741 = vpack.c.bf16 %v685, %v683
        %v742 = vpack.c.bf16 %v686, %v684
        %v743 = vpack.c.bf16 %v689, %v687
        %v744 = vpack.c.bf16 %v690, %v688
        %v745 = vpack.c.bf16 %v693, %v691
        %v746 = vpack.c.bf16 %v694, %v692
        %v747 = vpack.c.bf16 %v697, %v695
        %v748 = vpack.c.bf16 %v698, %v696
        %v749 = vpack.c.bf16 %v701, %v699
        %v750 = vpack.c.bf16 %v702, %v700
        %v751 = vpack.c.bf16 %v705, %v703
        %v752 = vpack.c.bf16 %v706, %v704
        %v753 = vpack.c.bf16 %v709, %v707
        %v754 = vpack.c.bf16 %v710, %v708
        %v755 = vpack.c.bf16 %v713, %v711
        %v756 = vpack.c.bf16 %v714, %v712
        %v757 = vpack.c.bf16 %v717, %v715
        %v758 = vpack.c.bf16 %v718, %v716
        %v759 = vpack.c.bf16 %v721, %v719
        %v760 = vpack.c.bf16 %v722, %v720
        %v761 = vpack.c.bf16 %v725, %v723
        %v762 = vpack.c.bf16 %v726, %v724
        %v763 = vpack.c.bf16 %v729, %v727
        %v764 = vpack.c.bf16 %v730, %v728
        %v765 = vpack.c.bf16 %v733, %v731
        %v766 = vpack.c.bf16 %v734, %v732
        %v767 = vld [vmem:[%s3] sm:$0xff]
        %v768 = vld [vmem:[%s3 + $0x8] sm:$0xff]
        %v769 = vld [vmem:[%s3 + $0x10] sm:$0xff]
        %v770 = vld [vmem:[%s3 + $0x18] sm:$0xff]
        %v771 = vld [vmem:[%s3 + $0x20] sm:$0xff]
        %v772 = vld [vmem:[%s3 + $0x28] sm:$0xff]
        %v773 = vld [vmem:[%s3 + $0x30] sm:$0xff]
        %v774 = vld [vmem:[%s3 + $0x38] sm:$0xff]
        %v775 = vld [vmem:[%s3 + $0x40] sm:$0xff]
        %v776 = vld [vmem:[%s3 + $0x48] sm:$0xff]
        %v777 = vld [vmem:[%s3 + $0x50] sm:$0xff]
        %v778 = vld [vmem:[%s3 + $0x58] sm:$0xff]
        %v779 = vld [vmem:[%s3 + $0x60] sm:$0xff]
        %v780 = vld [vmem:[%s3 + $0x68] sm:$0xff]
        %v781 = vld [vmem:[%s3 + $0x70] sm:$0xff]
        %v782 = vld [vmem:[%s3 + $0x78] sm:$0xff]
        %v783 = vld [vmem:[%s3 + $0x80] sm:$0xff]
        %v784 = vld [vmem:[%s3 + $0x88] sm:$0xff]
        %v785 = vld [vmem:[%s3 + $0x90] sm:$0xff]
        %v786 = vld [vmem:[%s3 + $0x98] sm:$0xff]
        %v787 = vld [vmem:[%s3 + $0xa0] sm:$0xff]
        %v788 = vld [vmem:[%s3 + $0xa8] sm:$0xff]
        %v789 = vld [vmem:[%s3 + $0xb0] sm:$0xff]
        %v790 = vld [vmem:[%s3 + $0xb8] sm:$0xff]
        %v791 = vld [vmem:[%s3 + $0xc0] sm:$0xff]
        %v792 = vld [vmem:[%s3 + $0xc8] sm:$0xff]
        %v793 = vld [vmem:[%s3 + $0xd0] sm:$0xff]
        %v794 = vld [vmem:[%s3 + $0xd8] sm:$0xff]
        %v795 = vld [vmem:[%s3 + $0xe0] sm:$0xff]
        %v796 = vld [vmem:[%s3 + $0xe8] sm:$0xff]
        %v797 = vld [vmem:[%s3 + $0xf0] sm:$0xff]
        %v798 = vld [vmem:[%s3 + $0xf8] sm:$0xff]
        %v799 = vld [vmem:[%s4] sm:$0x3]
        %v801 = vlaneseq
        %v802 = vshrl.u32 %v801, 7
        %v803 = vsub.s32 0, %v802
        %v804 = vrot.slane %v799, %v803
        %v805 = vlaneseq
        %v806 = vshrl.u32 %v805, 7
        %v807 = vsub.s32 1, %v806
        %v808 = vrot.slane %v799, %v807
        %v843 = vunpack.c.l.b16 %v767
        %v844 = vunpack.c.h.b16 %v767
        %v845 = vunpack.c.l.b16 %v768
        %v846 = vunpack.c.h.b16 %v768
        %v847 = vunpack.c.l.b16 %v769
        %v848 = vunpack.c.h.b16 %v769
        %v849 = vunpack.c.l.b16 %v770
        %v850 = vunpack.c.h.b16 %v770
        %v851 = vunpack.c.l.b16 %v771
        %v852 = vunpack.c.h.b16 %v771
        %v853 = vunpack.c.l.b16 %v772
        %v854 = vunpack.c.h.b16 %v772
        %v855 = vunpack.c.l.b16 %v773
        %v856 = vunpack.c.h.b16 %v773
        %v857 = vunpack.c.l.b16 %v774
        %v858 = vunpack.c.h.b16 %v774
        %v859 = vunpack.c.l.b16 %v775
        %v860 = vunpack.c.h.b16 %v775
        %v861 = vunpack.c.l.b16 %v776
        %v862 = vunpack.c.h.b16 %v776
        %v863 = vunpack.c.l.b16 %v777
        %v864 = vunpack.c.h.b16 %v777
        %v865 = vunpack.c.l.b16 %v778
        %v866 = vunpack.c.h.b16 %v778
        %v867 = vunpack.c.l.b16 %v779
        %v868 = vunpack.c.h.b16 %v779
        %v869 = vunpack.c.l.b16 %v780
        %v870 = vunpack.c.h.b16 %v780
        %v871 = vunpack.c.l.b16 %v781
        %v872 = vunpack.c.h.b16 %v781
        %v873 = vunpack.c.l.b16 %v782
        %v874 = vunpack.c.h.b16 %v782
        %v875 = vunpack.c.l.b16 %v783
        %v876 = vunpack.c.h.b16 %v783
        %v877 = vunpack.c.l.b16 %v784
        %v878 = vunpack.c.h.b16 %v784
        %v879 = vunpack.c.l.b16 %v785
        %v880 = vunpack.c.h.b16 %v785
        %v881 = vunpack.c.l.b16 %v786
        %v882 = vunpack.c.h.b16 %v786
        %v883 = vunpack.c.l.b16 %v787
        %v884 = vunpack.c.h.b16 %v787
        %v885 = vunpack.c.l.b16 %v788
        %v886 = vunpack.c.h.b16 %v788
        %v887 = vunpack.c.l.b16 %v789
        %v888 = vunpack.c.h.b16 %v789
        %v889 = vunpack.c.l.b16 %v790
        %v890 = vunpack.c.h.b16 %v790
        %v891 = vunpack.c.l.b16 %v791
        %v892 = vunpack.c.h.b16 %v791
        %v893 = vunpack.c.l.b16 %v792
        %v894 = vunpack.c.h.b16 %v792
        %v895 = vunpack.c.l.b16 %v793
        %v896 = vunpack.c.h.b16 %v793
        %v897 = vunpack.c.l.b16 %v794
        %v898 = vunpack.c.h.b16 %v794
        %v899 = vunpack.c.l.b16 %v795
        %v900 = vunpack.c.h.b16 %v795
        %v901 = vunpack.c.l.b16 %v796
        %v902 = vunpack.c.h.b16 %v796
        %v903 = vunpack.c.l.b16 %v797
        %v904 = vunpack.c.h.b16 %v797
        %v905 = vunpack.c.l.b16 %v798
        %v906 = vunpack.c.h.b16 %v798
        %v907 = vpack.c.b16 %v845, %v843
        %v908 = vpack.c.b16 %v846, %v844
        %v909 = vpack.c.b16 %v849, %v847
        %v910 = vpack.c.b16 %v850, %v848
        %v911 = vpack.c.b16 %v853, %v851
        %v912 = vpack.c.b16 %v854, %v852
        %v913 = vpack.c.b16 %v857, %v855
        %v914 = vpack.c.b16 %v858, %v856
        %v915 = vpack.c.b16 %v861, %v859
        %v916 = vpack.c.b16 %v862, %v860
        %v917 = vpack.c.b16 %v865, %v863
        %v918 = vpack.c.b16 %v866, %v864
        %v919 = vpack.c.b16 %v869, %v867
        %v920 = vpack.c.b16 %v870, %v868
        %v921 = vpack.c.b16 %v873, %v871
        %v922 = vpack.c.b16 %v874, %v872
        %v923 = vpack.c.b16 %v877, %v875
        %v924 = vpack.c.b16 %v878, %v876
        %v925 = vpack.c.b16 %v881, %v879
        %v926 = vpack.c.b16 %v882, %v880
        %v927 = vpack.c.b16 %v885, %v883
        %v928 = vpack.c.b16 %v886, %v884
        %v929 = vpack.c.b16 %v889, %v887
        %v930 = vpack.c.b16 %v890, %v888
        %v931 = vpack.c.b16 %v893, %v891
        %v932 = vpack.c.b16 %v894, %v892
        %v933 = vpack.c.b16 %v897, %v895
        %v934 = vpack.c.b16 %v898, %v896
        %v935 = vpack.c.b16 %v901, %v899
        %v936 = vpack.c.b16 %v902, %v900
        %v937 = vpack.c.b16 %v905, %v903
        %v938 = vpack.c.b16 %v906, %v904
        %971 = vmatprep.subr.bf16.mxu0 %v908
        %972 = vmatpush1.bf16.msra.mxu0 %v907
        %973 = vmatprep.subr.bf16.mxu0 %v910
        %974 = vmatpush1.bf16.msra.mxu0 %v909
        %975 = vmatprep.subr.bf16.mxu0 %v912
        %976 = vmatpush1.bf16.msra.mxu0 %v911
        %977 = vmatprep.subr.bf16.mxu0 %v914
        %978 = vmatpush1.bf16.msra.mxu0 %v913
        %979 = vmatprep.subr.bf16.mxu0 %v916
        %980 = vmatpush1.bf16.msra.mxu0 %v915
        %981 = vmatprep.subr.bf16.mxu0 %v918
        %982 = vmatpush1.bf16.msra.mxu0 %v917
        %983 = vmatprep.subr.bf16.mxu0 %v920
        %984 = vmatpush1.bf16.msra.mxu0 %v919
        %985 = vmatprep.subr.bf16.mxu0 %v922
        %986 = vmatpush1.bf16.msra.mxu0 %v921
        %987 = vmatprep.subr.bf16.mxu0 %v924
        %988 = vmatpush1.bf16.msra.mxu0 %v923
        %989 = vmatprep.subr.bf16.mxu0 %v926
        %990 = vmatpush1.bf16.msra.mxu0 %v925
        %991 = vmatprep.subr.bf16.mxu0 %v928
        %992 = vmatpush1.bf16.msra.mxu0 %v927
        %993 = vmatprep.subr.bf16.mxu0 %v930
        %994 = vmatpush1.bf16.msra.mxu0 %v929
        %995 = vmatprep.subr.bf16.mxu0 %v932
        %996 = vmatpush1.bf16.msra.mxu0 %v931
        %997 = vmatprep.subr.bf16.mxu0 %v934
        %998 = vmatpush1.bf16.msra.mxu0 %v933
        %999 = vmatprep.subr.bf16.mxu0 %v936
        %1000 = vmatpush1.bf16.msra.mxu0 %v935
        %1001 = vmatprep.subr.bf16.mxu0 %v938
        %1002 = vmatpush1.bf16.msra.mxu0 %v937
        %1003 = vmatprep.mubr.bf16.mxu0 %v736
        %1004 = vmatmul.mubr.bf16.gmra.mrb[0].mxu0 %v735
        %v1005 = vpop.f32.mrb[0].mxu0
        %v1006 = vadd.f32 %v804, %v1005
        %v1007 = vpop.f32.mrb[0].mxu0
        %v1008 = vadd.f32 %v808, %v1007
        %v1009 = vpop.f32.mrb[0].mxu0
        %v1010 = vadd.f32 %v804, %v1009
        %v1011 = vpop.f32.mrb[0].mxu0
        %v1012 = vadd.f32 %v808, %v1011
        %1013 = vmatprep.mubr.bf16.mxu0 %v738
        %1014 = vmatmul.mubr.bf16.gmra.mrb[0].mxu0 %v737
        %v1015 = vpop.f32.mrb[0].mxu0
        %v1016 = vadd.f32 %v804, %v1015
        %v1017 = vpop.f32.mrb[0].mxu0
        %v1018 = vadd.f32 %v808, %v1017
        %v1019 = vpop.f32.mrb[0].mxu0
        %v1020 = vadd.f32 %v804, %v1019
        %v1021 = vpop.f32.mrb[0].mxu0
        %v1022 = vadd.f32 %v808, %v1021
        %1023 = vmatprep.mubr.bf16.mxu0 %v740
        %1024 = vmatmul.mubr.bf16.gmra.mrb[0].mxu0 %v739
        %v1025 = vpop.f32.mrb[0].mxu0
        %v1026 = vadd.f32 %v804, %v1025
        %v1027 = vpop.f32.mrb[0].mxu0
        %v1028 = vadd.f32 %v808, %v1027
        %v1029 = vpop.f32.mrb[0].mxu0
        %v1030 = vadd.f32 %v804, %v1029
        %v1031 = vpop.f32.mrb[0].mxu0
        %v1032 = vadd.f32 %v808, %v1031
        %1033 = vmatprep.mubr.bf16.mxu0 %v742
        %1034 = vmatmul.mubr.bf16.gmra.mrb[0].mxu0 %v741
        %v1035 = vpop.f32.mrb[0].mxu0
        %v1036 = vadd.f32 %v804, %v1035
        %v1037 = vpop.f32.mrb[0].mxu0
        %v1038 = vadd.f32 %v808, %v1037
        %v1039 = vpop.f32.mrb[0].mxu0
        %v1040 = vadd.f32 %v804, %v1039
        %v1041 = vpop.f32.mrb[0].mxu0
        %v1042 = vadd.f32 %v808, %v1041
        %1043 = vmatprep.mubr.bf16.mxu0 %v744
        %1044 = vmatmul.mubr.bf16.gmra.mrb[0].mxu0 %v743
        %v1045 = vpop.f32.mrb[0].mxu0
        %v1046 = vadd.f32 %v804, %v1045
        %v1047 = vpop.f32.mrb[0].mxu0
        %v1048 = vadd.f32 %v808, %v1047
        %v1049 = vpop.f32.mrb[0].mxu0
        %v1050 = vadd.f32 %v804, %v1049
        %v1051 = vpop.f32.mrb[0].mxu0
        %v1052 = vadd.f32 %v808, %v1051
        %1053 = vmatprep.mubr.bf16.mxu0 %v746
        %1054 = vmatmul.mubr.bf16.gmra.mrb[0].mxu0 %v745
        %v1055 = vpop.f32.mrb[0].mxu0
        %v1056 = vadd.f32 %v804, %v1055
        %v1057 = vpop.f32.mrb[0].mxu0
        %v1058 = vadd.f32 %v808, %v1057
        %v1059 = vpop.f32.mrb[0].mxu0
        %v1060 = vadd.f32 %v804, %v1059
        %v1061 = vpop.f32.mrb[0].mxu0
        %v1062 = vadd.f32 %v808, %v1061
        %1063 = vmatprep.mubr.bf16.mxu0 %v748
        %1064 = vmatmul.mubr.bf16.gmra.mrb[0].mxu0 %v747
        %v1065 = vpop.f32.mrb[0].mxu0
        %v1066 = vadd.f32 %v804, %v1065
        %v1067 = vpop.f32.mrb[0].mxu0
        %v1068 = vadd.f32 %v808, %v1067
        %v1069 = vpop.f32.mrb[0].mxu0
        %v1070 = vadd.f32 %v804, %v1069
        %v1071 = vpop.f32.mrb[0].mxu0
        %v1072 = vadd.f32 %v808, %v1071
        %1073 = vmatprep.mubr.bf16.mxu0 %v750
        %1074 = vmatmul.mubr.bf16.gmra.mrb[0].mxu0 %v749
        %v1075 = vpop.f32.mrb[0].mxu0
        %v1076 = vadd.f32 %v804, %v1075
        %v1077 = vpop.f32.mrb[0].mxu0
        %v1078 = vadd.f32 %v808, %v1077
        %v1079 = vpop.f32.mrb[0].mxu0
        %v1080 = vadd.f32 %v804, %v1079
        %v1081 = vpop.f32.mrb[0].mxu0
        %v1082 = vadd.f32 %v808, %v1081
        %1083 = vmatprep.mubr.bf16.mxu0 %v752
        %1084 = vmatmul.mubr.bf16.gmra.mrb[0].mxu0 %v751
        %v1085 = vpop.f32.mrb[0].mxu0
        %v1086 = vadd.f32 %v804, %v1085
        %v1087 = vpop.f32.mrb[0].mxu0
        %v1088 = vadd.f32 %v808, %v1087
        %v1089 = vpop.f32.mrb[0].mxu0
        %v1090 = vadd.f32 %v804, %v1089
        %v1091 = vpop.f32.mrb[0].mxu0
        %v1092 = vadd.f32 %v808, %v1091
        %1093 = vmatprep.mubr.bf16.mxu0 %v754
        %1094 = vmatmul.mubr.bf16.gmra.mrb[0].mxu0 %v753
        %v1095 = vpop.f32.mrb[0].mxu0
        %v1096 = vadd.f32 %v804, %v1095
        %v1097 = vpop.f32.mrb[0].mxu0
        %v1098 = vadd.f32 %v808, %v1097
        %v1099 = vpop.f32.mrb[0].mxu0
        %v1100 = vadd.f32 %v804, %v1099
        %v1101 = vpop.f32.mrb[0].mxu0
        %v1102 = vadd.f32 %v808, %v1101
        %1103 = vmatprep.mubr.bf16.mxu0 %v756
        %1104 = vmatmul.mubr.bf16.gmra.mrb[0].mxu0 %v755
        %v1105 = vpop.f32.mrb[0].mxu0
        %v1106 = vadd.f32 %v804, %v1105
        %v1107 = vpop.f32.mrb[0].mxu0
        %v1108 = vadd.f32 %v808, %v1107
        %v1109 = vpop.f32.mrb[0].mxu0
        %v1110 = vadd.f32 %v804, %v1109
        %v1111 = vpop.f32.mrb[0].mxu0
        %v1112 = vadd.f32 %v808, %v1111
        %1113 = vmatprep.mubr.bf16.mxu0 %v758
        %1114 = vmatmul.mubr.bf16.gmra.mrb[0].mxu0 %v757
        %v1115 = vpop.f32.mrb[0].mxu0
        %v1116 = vadd.f32 %v804, %v1115
        %v1117 = vpop.f32.mrb[0].mxu0
        %v1118 = vadd.f32 %v808, %v1117
        %v1119 = vpop.f32.mrb[0].mxu0
        %v1120 = vadd.f32 %v804, %v1119
        %v1121 = vpop.f32.mrb[0].mxu0
        %v1122 = vadd.f32 %v808, %v1121
        %1123 = vmatprep.mubr.bf16.mxu0 %v760
        %1124 = vmatmul.mubr.bf16.gmra.mrb[0].mxu0 %v759
        %v1125 = vpop.f32.mrb[0].mxu0
        %v1126 = vadd.f32 %v804, %v1125
        %v1127 = vpop.f32.mrb[0].mxu0
        %v1128 = vadd.f32 %v808, %v1127
        %v1129 = vpop.f32.mrb[0].mxu0
        %v1130 = vadd.f32 %v804, %v1129
        %v1131 = vpop.f32.mrb[0].mxu0
        %v1132 = vadd.f32 %v808, %v1131
        %1133 = vmatprep.mubr.bf16.mxu0 %v762
        %1134 = vmatmul.mubr.bf16.gmra.mrb[0].mxu0 %v761
        %v1135 = vpop.f32.mrb[0].mxu0
        %v1136 = vadd.f32 %v804, %v1135
        %v1137 = vpop.f32.mrb[0].mxu0
        %v1138 = vadd.f32 %v808, %v1137
        %v1139 = vpop.f32.mrb[0].mxu0
        %v1140 = vadd.f32 %v804, %v1139
        %v1141 = vpop.f32.mrb[0].mxu0
        %v1142 = vadd.f32 %v808, %v1141
        %1143 = vmatprep.mubr.bf16.mxu0 %v764
        %1144 = vmatmul.mubr.bf16.gmra.mrb[0].mxu0 %v763
        %v1145 = vpop.f32.mrb[0].mxu0
        %v1146 = vadd.f32 %v804, %v1145
        %v1147 = vpop.f32.mrb[0].mxu0
        %v1148 = vadd.f32 %v808, %v1147
        %v1149 = vpop.f32.mrb[0].mxu0
        %v1150 = vadd.f32 %v804, %v1149
        %v1151 = vpop.f32.mrb[0].mxu0
        %v1152 = vadd.f32 %v808, %v1151
        %1153 = vmatprep.mubr.bf16.mxu0 %v766
        %1154 = vmatmul.mubr.bf16.gmra.mrb[0].mxu0 %v765
        %v1155 = vpop.f32.mrb[0].mxu0
        %v1156 = vadd.f32 %v804, %v1155
        %v1157 = vpop.f32.mrb[0].mxu0
        %v1158 = vadd.f32 %v808, %v1157
        %v1159 = vpop.f32.mrb[0].mxu0
        %v1160 = vadd.f32 %v804, %v1159
        %v1161 = vpop.f32.mrb[0].mxu0
        %v1162 = vadd.f32 %v808, %v1161
        %1163 = vdwg.mxu0
        %v1164 = vmax.f32 %v1006, 0.0
        %v1165 = vmax.f32 %v1008, 0.0
        %v1166 = vmax.f32 %v1010, 0.0
        %v1167 = vmax.f32 %v1012, 0.0
        %v1168 = vmax.f32 %v1016, 0.0
        %v1169 = vmax.f32 %v1018, 0.0
        %v1170 = vmax.f32 %v1020, 0.0
        %v1171 = vmax.f32 %v1022, 0.0
        %v1172 = vmax.f32 %v1026, 0.0
        %v1173 = vmax.f32 %v1028, 0.0
        %v1174 = vmax.f32 %v1030, 0.0
        %v1175 = vmax.f32 %v1032, 0.0
        %v1176 = vmax.f32 %v1036, 0.0
        %v1177 = vmax.f32 %v1038, 0.0
        %v1178 = vmax.f32 %v1040, 0.0
        %v1179 = vmax.f32 %v1042, 0.0
        %v1180 = vmax.f32 %v1046, 0.0
        %v1181 = vmax.f32 %v1048, 0.0
        %v1182 = vmax.f32 %v1050, 0.0
        %v1183 = vmax.f32 %v1052, 0.0
        %v1184 = vmax.f32 %v1056, 0.0
        %v1185 = vmax.f32 %v1058, 0.0
        %v1186 = vmax.f32 %v1060, 0.0
        %v1187 = vmax.f32 %v1062, 0.0
        %v1188 = vmax.f32 %v1066, 0.0
        %v1189 = vmax.f32 %v1068, 0.0
        %v1190 = vmax.f32 %v1070, 0.0
        %v1191 = vmax.f32 %v1072, 0.0
        %v1192 = vmax.f32 %v1076, 0.0
        %v1193 = vmax.f32 %v1078, 0.0
        %v1194 = vmax.f32 %v1080, 0.0
        %v1195 = vmax.f32 %v1082, 0.0
        %v1196 = vmax.f32 %v1086, 0.0
        %v1197 = vmax.f32 %v1088, 0.0
        %v1198 = vmax.f32 %v1090, 0.0
        %v1199 = vmax.f32 %v1092, 0.0
        %v1200 = vmax.f32 %v1096, 0.0
        %v1201 = vmax.f32 %v1098, 0.0
        %v1202 = vmax.f32 %v1100, 0.0
        %v1203 = vmax.f32 %v1102, 0.0
        %v1204 = vmax.f32 %v1106, 0.0
        %v1205 = vmax.f32 %v1108, 0.0
        %v1206 = vmax.f32 %v1110, 0.0
        %v1207 = vmax.f32 %v1112, 0.0
        %v1208 = vmax.f32 %v1116, 0.0
        %v1209 = vmax.f32 %v1118, 0.0
        %v1210 = vmax.f32 %v1120, 0.0
        %v1211 = vmax.f32 %v1122, 0.0
        %v1212 = vmax.f32 %v1126, 0.0
        %v1213 = vmax.f32 %v1128, 0.0
        %v1214 = vmax.f32 %v1130, 0.0
        %v1215 = vmax.f32 %v1132, 0.0
        %v1216 = vmax.f32 %v1136, 0.0
        %v1217 = vmax.f32 %v1138, 0.0
        %v1218 = vmax.f32 %v1140, 0.0
        %v1219 = vmax.f32 %v1142, 0.0
        %v1220 = vmax.f32 %v1146, 0.0
        %v1221 = vmax.f32 %v1148, 0.0
        %v1222 = vmax.f32 %v1150, 0.0
        %v1223 = vmax.f32 %v1152, 0.0
        %v1224 = vmax.f32 %v1156, 0.0
        %v1225 = vmax.f32 %v1158, 0.0
        %v1226 = vmax.f32 %v1160, 0.0
        %v1227 = vmax.f32 %v1162, 0.0
        %v1228 = vpack.c.bf16 %v1166, %v1164
        %v1229 = vpack.c.bf16 %v1167, %v1165
        %v1230 = vpack.c.bf16 %v1170, %v1168
        %v1231 = vpack.c.bf16 %v1171, %v1169
        %v1232 = vpack.c.bf16 %v1174, %v1172
        %v1233 = vpack.c.bf16 %v1175, %v1173
        %v1234 = vpack.c.bf16 %v1178, %v1176
        %v1235 = vpack.c.bf16 %v1179, %v1177
        %v1236 = vpack.c.bf16 %v1182, %v1180
        %v1237 = vpack.c.bf16 %v1183, %v1181
        %v1238 = vpack.c.bf16 %v1186, %v1184
        %v1239 = vpack.c.bf16 %v1187, %v1185
        %v1240 = vpack.c.bf16 %v1190, %v1188
        %v1241 = vpack.c.bf16 %v1191, %v1189
        %v1242 = vpack.c.bf16 %v1194, %v1192
        %v1243 = vpack.c.bf16 %v1195, %v1193
        %v1244 = vpack.c.bf16 %v1198, %v1196
        %v1245 = vpack.c.bf16 %v1199, %v1197
        %v1246 = vpack.c.bf16 %v1202, %v1200
        %v1247 = vpack.c.bf16 %v1203, %v1201
        %v1248 = vpack.c.bf16 %v1206, %v1204
        %v1249 = vpack.c.bf16 %v1207, %v1205
        %v1250 = vpack.c.bf16 %v1210, %v1208
        %v1251 = vpack.c.bf16 %v1211, %v1209
        %v1252 = vpack.c.bf16 %v1214, %v1212
        %v1253 = vpack.c.bf16 %v1215, %v1213
        %v1254 = vpack.c.bf16 %v1218, %v1216
        %v1255 = vpack.c.bf16 %v1219, %v1217
        %v1256 = vpack.c.bf16 %v1222, %v1220
        %v1257 = vpack.c.bf16 %v1223, %v1221
        %v1258 = vpack.c.bf16 %v1226, %v1224
        %v1259 = vpack.c.bf16 %v1227, %v1225
        %v1260 = vld [vmem:[%s5] sm:$0x3]
        %s1261 = sld [smem:[#allocation2]]
        %v1262 = vstv %s1261
        %v1265 = vunpack.c.l.s4 1966171168
        %v1266 = vunpack.c.0.s8 %v1265
        %v1267 = vlaneseq
        %v1268 = vshrl.u32 %v1267, 7
        %v1269 = vsub.s32 %v1266, %v1268
        %v1270 = vrot.slane %v1260, %v1269
        %v1271 = vcombine.high %v1270, %v1270
        %v1273 = vunpack.c.l.s4 1966171168
        %v1274 = vunpack.c.0.s8 %v1273
        %v1275 = vlaneseq
        %v1276 = vshrl.u32 %v1275, 7
        %v1277 = vsub.s32 %v1274, %v1276
        %v1278 = vrot.slane %v1270, %v1277
        %v1280 = vunpack.c.l.s4 1966171168
        %v1281 = vunpack.c.0.s8 %v1280
        %v1282 = vlaneseq
        %v1283 = vshrl.u32 %v1282, 7
        %v1284 = vsub.s32 %v1281, %v1283
        %v1285 = vrot.slane %v1271, %v1284
        %1288 = vmatprep.subr.bf16.mxu0 %v1229
        %1289 = vmatpush1.bf16.xpose.msra.mxu0 %v1228
        %1290 = vmatprep.subr.bf16.mxu0 %v1231
        %1291 = vmatpush1.bf16.xpose.msra.mxu0 %v1230
        %1292 = vmatprep.subr.bf16.mxu0 %v1233
        %1293 = vmatpush1.bf16.xpose.msra.mxu0 %v1232
        %1294 = vmatprep.subr.bf16.mxu0 %v1235
        %1295 = vmatpush1.bf16.xpose.msra.mxu0 %v1234
        %1296 = vmatprep.subr.bf16.mxu0 %v1237
        %1297 = vmatpush1.bf16.xpose.msra.mxu0 %v1236
        %1298 = vmatprep.subr.bf16.mxu0 %v1239
        %1299 = vmatpush1.bf16.xpose.msra.mxu0 %v1238
        %1300 = vmatprep.subr.bf16.mxu0 %v1241
        %1301 = vmatpush1.bf16.xpose.msra.mxu0 %v1240
        %1302 = vmatprep.subr.bf16.mxu0 %v1243
        %1303 = vmatpush1.bf16.xpose.msra.mxu0 %v1242
        %1304 = vmatprep.subr.bf16.mxu0 %v1245
        %1305 = vmatpush1.bf16.xpose.msra.mxu0 %v1244
        %1306 = vmatprep.subr.bf16.mxu0 %v1247
        %1307 = vmatpush1.bf16.xpose.msra.mxu0 %v1246
        %1308 = vmatprep.subr.bf16.mxu0 %v1249
        %1309 = vmatpush1.bf16.xpose.msra.mxu0 %v1248
        %1310 = vmatprep.subr.bf16.mxu0 %v1251
        %1311 = vmatpush1.bf16.xpose.msra.mxu0 %v1250
        %1312 = vmatprep.subr.bf16.mxu0 %v1253
        %1313 = vmatpush1.bf16.xpose.msra.mxu0 %v1252
        %1314 = vmatprep.subr.bf16.mxu0 %v1255
        %1315 = vmatpush1.bf16.xpose.msra.mxu0 %v1254
        %1316 = vmatprep.subr.bf16.mxu0 %v1257
        %1317 = vmatpush1.bf16.xpose.msra.mxu0 %v1256
        %1318 = vmatprep.subr.bf16.mxu0 %v1259
        %1319 = vmatpush1.bf16.xpose.msra.mxu0 %v1258
        %1320 = vmatprep.mubr.bf16.mxu0 %v1285
        %1321 = vmatmul.mubr.bf16.gmra.mrb[0].mxu0 %v1278
        %v1322 = vpop.f32.mrb[0].mxu0
        %v1323 = vadd.f32 %v1262, %v1322
        %v1324 = vpop.f32.mrb[0].mxu0
        %v1325 = vadd.f32 %v1262, %v1324
        %v1326 = vpop.f32.mrb[0].mxu0
        %v1327 = vpop.f32.mrb[0].mxu0
        %1328 = vdwg.mxu0
        %v1331 = vcombine.low %v1323, %v1325
        %v1333 = vunpack.c.l.s4 1966171168
        %v1334 = vunpack.c.0.s8 %v1333
        %v1335 = vlaneseq
        %v1336 = vshrl.u32 %v1335, 7
        %v1337 = vsub.s32 %v1334, %v1336
        %v1338 = vrot.slane %v1331, %v1337
        %v1340 = vunpack.c.l.s4 1966171168
        %v1341 = vunpack.c.0.s8 %v1340
        %v1342 = vlaneseq
        %v1343 = vshrl.u32 %v1342, 7
        %v1344 = vsub.s32 %v1341, %v1343
        %v1345 = vrot.slane %v1338, %v1344
        %v1347 = vlaneseq
        %vm1348 = vcmp.ge.s32.totalorder %v1347, 0
        %vm1349 = vcmp.lt.s32.totalorder %v1347, 256
        %vm1350 = vmand %vm1348, %vm1349
        %1351 = vst.msk [vmem:[%s273] sm:$0x3] %vm1350, %v1345
        %s1352 = sand.u32 %s182, 1
        %s1353 = scalar_lea.sflag [#allocation4], %s1352
        %s1354 = sand.u32 %s182, 1
        %s1355 = smul.addr %s1354, 2
        %s1356 = scalar_lea.vmem [#allocation3], %s1355
        // Predicated region
        $region49: #{tpu_custom_call.1} parent=47 // pred_check
          %p1357 = pneg %p192
        $region50: #{tpu_custom_call.1} parent=47 // pred_check_branch
          %1359 = sbr.rel (%p1357) target = $region52
        $region51: #{tpu_custom_call.1} parent=47 // pred_region
          %s1361 = ssub.s32 32, 32
          %1362 = vsyncadd %s1353, %s1361
          %s1363 = smul.addr %s22, 2
          %s1364 = smul.addr %s1363, 16
          %s1365 = scalar_lea.hbm %s7, %s1364
          %s1367 = sshll.u32 %s1356, 4
          %s1368 = int_to_ptr.vmem [resolvable:$true] %s1367
          %1370 = dma.vmem_to_hbm [thread:$0]  %s1368, 32, %s1365, %s1353
        $region52: #{tpu_custom_call.1} parent=47 // pred_fallthru
          _
      $region48: #{tpu_custom_call.1} parent=5 // pred_fallthru
        _
      %p1371 = scmp.le.s32.totalorder 2, %s17
      // Predicated region
      $region53: #{tpu_custom_call.1} parent=5 // pred_check
        %p1372 = pneg %p1371
      $region54: #{tpu_custom_call.1} parent=5 // pred_check_branch
        %1374 = sbr.rel (%p1372) target = $region56
      $region55: #{tpu_custom_call.1} parent=5 // pred_region
        %s1375 = ssub.s32 %s17, 2
        // Predicated region
        $region57: #{tpu_custom_call.1} parent=55 // pred_check
          %p1376 = pneg %p198
        $region58: #{tpu_custom_call.1} parent=55 // pred_check_branch
          %1378 = sbr.rel (%p1376) target = $region60
        $region59: #{tpu_custom_call.1} parent=55 // pred_region
          %s1379 = sand.u32 %s183, 1
          %s1380 = scalar_lea.sflag [#allocation4], %s1379
          %s1381 = sand.u32 %s183, 1
          %s1382 = smul.addr %s1381, 2
          %s1383 = scalar_lea.vmem [#allocation3], %s1382
          %1384 = dma.done %s1380, 32
        $region60: #{tpu_custom_call.1} parent=55 // pred_fallthru
          _
      $region56: #{tpu_custom_call.1} parent=5 // pred_fallthru
        _
    $region6: #{tpu_custom_call.1} parent=1 // loop_footer
      %s21 = sadd.s32 1, %s17
    $region7: #{tpu_custom_call.1} parent=1 // loop_footer_branch
      %16 = sbr.rel target = $region3
    $region8: #{tpu_custom_call.1} parent=1 // loop_exit
      _
    %1385 = vsyncpa [#allocation4], 1
    %s1386 = scalar_lea.sflag [#allocation4], 1
    %1387 = vsyncpa %s1386, 1

</llo_original>
